<compile_context>
chip_gen: v6e
topology: v6e:2x2x1
jax: 0.10.0
libtpu: 0.0.40
codegen_flags: <defaults>
</compile_context>

<pallas_src>
import functools

import jax
import jax.numpy as jnp
from jax.experimental import pallas as pl
from jax.experimental.pallas import tpu as pltpu

LANE = 128          # lane width of one vreg; everything is padded to this
NEG_BIG = -1e30     # bias for padded output lanes -> exp() underflows to 0


def _mlp_kernel(x_ref,
                w0_ref, b0_ref,
                w1_ref, b1_ref,
                w2_ref, b2_ref,
                w3_ref, b3_ref,
                logp_ref):
    """Fused MLP forward: 3x (Linear+ReLU) + Linear + LogSoftmax, all in VMEM."""
    h = x_ref[...]                                            # (1, 128) f32

    # Hidden layers: bf16 MXU operands, f32 accumulate, f32 ReLU.
    for w_ref, b_ref in ((w0_ref, b0_ref), (w1_ref, b1_ref), (w2_ref, b2_ref)):
        z = jnp.dot(h.astype(jnp.bfloat16), w_ref[...],
                    preferred_element_type=jnp.float32) + b_ref[...]
        h = jnp.maximum(z, 0.0)

    # Output layer (padded lanes get bias = -1e30 -> no softmax contribution).
    logits = jnp.dot(h.astype(jnp.bfloat16), w3_ref[...],
                     preferred_element_type=jnp.float32) + b3_ref[...]

    # log_softmax over the lane axis (== PyTorch dim=0 on the flat vector).
    m = jnp.max(logits, axis=-1, keepdims=True)
    lse = jnp.log(jnp.sum(jnp.exp(logits - m), axis=-1, keepdims=True)) + m
    logp_ref[...] = logits - lse


def init_params(key, num_ap, num_room, layers=(64, 32, 16)):
    """PyTorch-style uniform(-1/sqrt(fan_in), 1/sqrt(fan_in)) init + TPU packing."""
    dims = [num_ap] + list(layers) + [num_room]
    n_layers = len(dims) - 1
    keys = jax.random.split(key, 2 * n_layers)

    raw = []          # (W (out,in) f32, b (out,) f32) per layer -- for the reference
    packed = []       # interleaved [W^T padded bf16 (128,128), b padded f32 (1,128)]
    for li in range(n_layers):
        fan_in, fan_out = dims[li], dims[li + 1]
        k = 1.0 / jnp.sqrt(jnp.float32(fan_in))
        w = jax.random.uniform(keys[2 * li], (fan_out, fan_in), jnp.float32, -k, k)
        b = jax.random.uniform(keys[2 * li + 1], (fan_out,), jnp.float32, -k, k)
        raw.append((w, b))

        wt_pad = jnp.zeros((LANE, LANE), jnp.float32).at[:fan_in, :fan_out].set(w.T)
        pad_bias = NEG_BIG if li == n_layers - 1 else 0.0
        b_pad = jnp.full((1, LANE), pad_bias, jnp.float32).at[0, :fan_out].set(b)
        packed.extend([wt_pad.astype(jnp.bfloat16), b_pad])

    return {
        "num_ap": num_ap,
        "num_room": num_room,
        "n_layers": n_layers,
        "raw": raw,
        "packed": tuple(packed),
    }


def mlp_forward(params, x):
    """Mirrors MLP.forward: returns log-probs of shape (numRoom,)."""
    num_room = params["num_room"]
    num_ap = params["num_ap"]
    n_layers = params["n_layers"]

    x_flat = x.reshape(1, -1).astype(jnp.float32)            # Input.view(1, 1, -1)
    x_pad = jnp.zeros((1, LANE), jnp.float32).at[:, :num_ap].set(x_flat)

    vmem = pl.BlockSpec(memory_space=pltpu.MemorySpace.VMEM)
    weight_bytes = n_layers * (LANE * LANE * 2 + LANE * 4)    # bf16 W + f32 b
    cost = pl.CostEstimate(
        flops=2 * n_layers * LANE * LANE,                     # four (1,128)x(128,128) dots
        transcendentals=LANE,                                 # softmax exp
        bytes_accessed=weight_bytes + 2 * LANE * 4,           # + x_pad + logp out
    )

    logp_pad = pl.pallas_call(
        _mlp_kernel,
        out_shape=jax.ShapeDtypeStruct((1, LANE), jnp.float32),
        in_specs=[vmem] * (1 + 2 * n_layers),
        out_specs=vmem,
        compiler_params=pltpu.CompilerParams(vmem_limit_bytes=4 * 1024 * 1024),
        cost_estimate=cost,
    )(x_pad, *params["packed"])

    return logp_pad[0, :num_room]


def _reference_forward(params, x):
    """Pure-JAX reference mirroring the kernel's bf16-operand / f32-accumulate math."""
    def q(v):  # bf16 rounding, computed back in f32
        return v.astype(jnp.bfloat16).astype(jnp.float32)

    raw = params["raw"]
    h = x.reshape(1, -1).astype(jnp.float32)
    for li, (w, b) in enumerate(raw):
        z = q(h) @ q(w).T + b
        h = z if li == len(raw) - 1 else jnp.maximum(z, 0.0)
    return jax.nn.log_softmax(h.reshape(-1), axis=0)


if __name__ == "__main__":
    num_ap, num_room = 16, 8
    layers = (64, 32, 16)

    key = jax.random.PRNGKey(0)
    pkey, xkey = jax.random.split(key)
    params = init_params(pkey, num_ap, num_room, layers)
    x = jax.random.normal(xkey, (1, 1, num_ap), jnp.float32)   # input -> (1, 1, numAP)

    out = mlp_forward(params, x)
    jax.block_until_ready(out)

    ref = _reference_forward(params, x)
    assert out.shape == (num_room,)
    assert bool(jnp.all(jnp.isfinite(out)))
    # bf16 operands -> slightly looser tolerance than pure-f32.
    assert jnp.allclose(out, ref, atol=1e-4), (out, ref)
    # log-softmax sanity: probabilities sum to 1.
    assert jnp.allclose(jnp.sum(jnp.exp(out)), 1.0, atol=1e-4)

    print("KERNEL_OK")
</pallas_src>

<mosaic_0001>
module attributes {stable_mosaic.version = 11 : i64} {
  func.func @_mlp_kernel(%arg0: memref<1x128xf32, #tpu.memory_space<vmem>>, %arg1: memref<128x128xbf16, #tpu.memory_space<vmem>>, %arg2: memref<1x128xf32, #tpu.memory_space<vmem>>, %arg3: memref<128x128xbf16, #tpu.memory_space<vmem>>, %arg4: memref<1x128xf32, #tpu.memory_space<vmem>>, %arg5: memref<128x128xbf16, #tpu.memory_space<vmem>>, %arg6: memref<1x128xf32, #tpu.memory_space<vmem>>, %arg7: memref<128x128xbf16, #tpu.memory_space<vmem>>, %arg8: memref<1x128xf32, #tpu.memory_space<vmem>>, %arg9: memref<1x128xf32, #tpu.memory_space<vmem>>) attributes {dimension_semantics = [], scalar_prefetch = 0 : i64, scratch_operands = 0 : i64, tpu.core_type = #tpu.core_type<tc>} {
    %c0 = arith.constant 0 : index
    %c0_0 = arith.constant 0 : index
    %0 = vector.load %arg0[%c0, %c0_0] : memref<1x128xf32, #tpu.memory_space<vmem>>, vector<1x128xf32>
    %1 = arith.truncf %0 : vector<1x128xf32> to vector<1x128xbf16>
    %c0_1 = arith.constant 0 : index
    %c0_2 = arith.constant 0 : index
    %2 = vector.load %arg1[%c0_1, %c0_2] : memref<128x128xbf16, #tpu.memory_space<vmem>>, vector<128x128xbf16>
    %cst = arith.constant dense<0.000000e+00> : vector<1x128xf32>
    %3 = tpu.matmul %1, %2, %cst {dimension_numbers = #tpu.dot_dimension_numbers<[1], [0], [0], [1], [0, 0, 1, 1], [], []>} : vector<1x128xbf16>, vector<128x128xbf16>, vector<1x128xf32> -> vector<1x128xf32>
    %c0_3 = arith.constant 0 : index
    %c0_4 = arith.constant 0 : index
    %4 = vector.load %arg2[%c0_3, %c0_4] : memref<1x128xf32, #tpu.memory_space<vmem>>, vector<1x128xf32>
    %5 = arith.addf %3, %4 : vector<1x128xf32>
    %cst_5 = arith.constant 0.000000e+00 : f32
    %6 = vector.broadcast %cst_5 : f32 to vector<1x128xf32>
    %7 = arith.maximumf %5, %6 : vector<1x128xf32>
    %8 = arith.truncf %7 : vector<1x128xf32> to vector<1x128xbf16>
    %c0_6 = arith.constant 0 : index
    %c0_7 = arith.constant 0 : index
    %9 = vector.load %arg3[%c0_6, %c0_7] : memref<128x128xbf16, #tpu.memory_space<vmem>>, vector<128x128xbf16>
    %cst_8 = arith.constant dense<0.000000e+00> : vector<1x128xf32>
    %10 = tpu.matmul %8, %9, %cst_8 {dimension_numbers = #tpu.dot_dimension_numbers<[1], [0], [0], [1], [0, 0, 1, 1], [], []>} : vector<1x128xbf16>, vector<128x128xbf16>, vector<1x128xf32> -> vector<1x128xf32>
    %c0_9 = arith.constant 0 : index
    %c0_10 = arith.constant 0 : index
    %11 = vector.load %arg4[%c0_9, %c0_10] : memref<1x128xf32, #tpu.memory_space<vmem>>, vector<1x128xf32>
    %12 = arith.addf %10, %11 : vector<1x128xf32>
    %cst_11 = arith.constant 0.000000e+00 : f32
    %13 = vector.broadcast %cst_11 : f32 to vector<1x128xf32>
    %14 = arith.maximumf %12, %13 : vector<1x128xf32>
    %15 = arith.truncf %14 : vector<1x128xf32> to vector<1x128xbf16>
    %c0_12 = arith.constant 0 : index
    %c0_13 = arith.constant 0 : index
    %16 = vector.load %arg5[%c0_12, %c0_13] : memref<128x128xbf16, #tpu.memory_space<vmem>>, vector<128x128xbf16>
    %cst_14 = arith.constant dense<0.000000e+00> : vector<1x128xf32>
    %17 = tpu.matmul %15, %16, %cst_14 {dimension_numbers = #tpu.dot_dimension_numbers<[1], [0], [0], [1], [0, 0, 1, 1], [], []>} : vector<1x128xbf16>, vector<128x128xbf16>, vector<1x128xf32> -> vector<1x128xf32>
    %c0_15 = arith.constant 0 : index
    %c0_16 = arith.constant 0 : index
    %18 = vector.load %arg6[%c0_15, %c0_16] : memref<1x128xf32, #tpu.memory_space<vmem>>, vector<1x128xf32>
    %19 = arith.addf %17, %18 : vector<1x128xf32>
    %cst_17 = arith.constant 0.000000e+00 : f32
    %20 = vector.broadcast %cst_17 : f32 to vector<1x128xf32>
    %21 = arith.maximumf %19, %20 : vector<1x128xf32>
    %22 = arith.truncf %21 : vector<1x128xf32> to vector<1x128xbf16>
    %c0_18 = arith.constant 0 : index
    %c0_19 = arith.constant 0 : index
    %23 = vector.load %arg7[%c0_18, %c0_19] : memref<128x128xbf16, #tpu.memory_space<vmem>>, vector<128x128xbf16>
    %cst_20 = arith.constant dense<0.000000e+00> : vector<1x128xf32>
    %24 = tpu.matmul %22, %23, %cst_20 {dimension_numbers = #tpu.dot_dimension_numbers<[1], [0], [0], [1], [0, 0, 1, 1], [], []>} : vector<1x128xbf16>, vector<128x128xbf16>, vector<1x128xf32> -> vector<1x128xf32>
    %c0_21 = arith.constant 0 : index
    %c0_22 = arith.constant 0 : index
    %25 = vector.load %arg8[%c0_21, %c0_22] : memref<1x128xf32, #tpu.memory_space<vmem>>, vector<1x128xf32>
    %26 = arith.addf %24, %25 : vector<1x128xf32>
    %cst_23 = arith.constant dense<0xFF800000> : vector<1xf32>
    %27 = vector.multi_reduction <maximumf>, %26, %cst_23 [1] : vector<1x128xf32> to vector<1xf32>
    %28 = vector.shape_cast %27 : vector<1xf32> to vector<1x1xf32>
    %29 = vector.broadcast %28 : vector<1x1xf32> to vector<1x128xf32>
    %30 = arith.subf %26, %29 : vector<1x128xf32>
    %31 = math.exp %30 : vector<1x128xf32>
    %cst_24 = arith.constant dense<0.000000e+00> : vector<1xf32>
    %32 = vector.multi_reduction <add>, %31, %cst_24 [1] : vector<1x128xf32> to vector<1xf32>
    %33 = vector.shape_cast %32 : vector<1xf32> to vector<1x1xf32>
    %34 = math.log %33 : vector<1x1xf32>
    %35 = arith.addf %34, %28 : vector<1x1xf32>
    %36 = vector.broadcast %35 : vector<1x1xf32> to vector<1x128xf32>
    %37 = arith.subf %26, %36 : vector<1x128xf32>
    %c0_25 = arith.constant 0 : index
    %c0_26 = arith.constant 0 : index
    %38 = vector.load %arg9[%c0_25, %c0_26] : memref<1x128xf32, #tpu.memory_space<vmem>>, vector<1x128xf32>
    tpu.vector_store %arg9[%c0_25, %c0_26], %37 {strides = array<i32>} : memref<1x128xf32, #tpu.memory_space<vmem>>, vector<1x128xf32>,
    return
  }
}

</mosaic_0001>

<llo_original>
// kernel: tpu_custom_call.1
$region0: #{tpu_custom_call.1}
  #allocation0 [shape = 'u32[]', space=smem, size = 0x4, offset = 0x4, fixed_abs, tag = 'smem constant byte address 0x4 - core index']
  #allocation1 [shape = 'u32[144,128]{1,0:T(1,128)}', space=vmem, size = 0x12000, scoped, tag = 'internal scratch']
  %s0 = inlined_call_operand.hbm [shape: f32[1,128], index: 0, kind: input, shape index: {}]
  %s1 = inlined_call_operand.hbm [shape: bf16[128,128], index: 1, kind: input, shape index: {}]
  %s2 = inlined_call_operand.vmem [shape: f32[1,128], index: 2, kind: input, shape index: {}]
  %s3 = inlined_call_operand.hbm [shape: bf16[128,128], index: 3, kind: input, shape index: {}]
  %s4 = inlined_call_operand.vmem [shape: f32[1,128], index: 4, kind: input, shape index: {}]
  %s5 = inlined_call_operand.hbm [shape: bf16[128,128], index: 5, kind: input, shape index: {}]
  %s6 = inlined_call_operand.vmem [shape: f32[1,128], index: 6, kind: input, shape index: {}]
  %s7 = inlined_call_operand.hbm [shape: bf16[128,128], index: 7, kind: input, shape index: {}]
  %s8 = inlined_call_operand.vmem [shape: f32[1,128], index: 8, kind: input, shape index: {}]
  %s9 = inlined_call_operand.hbm [shape: f32[1,128], index: 9, kind: output, shape index: {}]
  %s10 = sld [smem:[#allocation0]]
  $region66: #{tpu_custom_call.1} parent=0
    _
  %s12 = ssub.s32 1, %s10
  %s13 = scalar_select 0, %s12, %s10
  $region1: #{tpu_custom_call.1} parent=0
    #allocation2 [shape = 'u8[512]{0}', space=vmem, size = 0x400, scoped, tag = 'input window, operand 0, single buffered']
    #allocation3 [shape = 's32[1]{0}', space=sflag, size = 0x4, scoped, tag = 'scoped memory for tpu_custom_call.1']
    #allocation4 [shape = 's32[1]{0}', space=sflag, size = 0x4, scoped, tag = 'scoped memory for tpu_custom_call.1']
    #allocation5 [shape = 'u8[32768]{0}', space=vmem, size = 0x8000, scoped, tag = 'input window, operand 1, single buffered']
    #allocation6 [shape = 's32[1]{0}', space=sflag, size = 0x4, scoped, tag = 'scoped memory for tpu_custom_call.1']
    #allocation7 [shape = 'u8[32768]{0}', space=vmem, size = 0x8000, scoped, tag = 'input window, operand 3, single buffered']
    #allocation8 [shape = 'u8[32768]{0}', space=vmem, size = 0x8000, scoped, tag = 'input window, operand 5, single buffered']
    #allocation9 [shape = 's32[1]{0}', space=sflag, size = 0x4, scoped, tag = 'scoped memory for tpu_custom_call.1']
    #allocation10 [shape = 'u8[32768]{0}', space=vmem, size = 0x8000, scoped, tag = 'input window, operand 7, single buffered']
    #allocation11 [shape = 'u8[512]{0}', space=vmem, size = 0x400, scoped, tag = 'output window, operand 0, single buffered']
    %14 = vsyncpa [#allocation3], 0
    %15 = vsyncpa [#allocation6], 0
    %16 = vsyncpa [#allocation9], 0
    %17 = vsyncpa [#allocation4], 0
    // Predicated region
    $region2: #{tpu_custom_call.1} parent=1 // pred_check
      _
    $region3: #{tpu_custom_call.1} parent=1 // pred_check_branch
      %19 = sbr.rel (0) target = $region5
    $region4: #{tpu_custom_call.1} parent=1 // pred_region
      %s21 = ssub.s32 16, 16
      %22 = vsyncadd [#allocation3], %s21
      %s24 = sshll.u32 [#allocation2], 4
      %s25 = int_to_ptr.vmem [resolvable:$true] %s24
      %27 = dma.hbm_to_vmem [thread:$0]  %s0, 16, %s25, [#allocation3]
    $region5: #{tpu_custom_call.1} parent=1 // pred_fallthru
      _
    // Predicated region
    $region6: #{tpu_custom_call.1} parent=1 // pred_check
      _
    $region7: #{tpu_custom_call.1} parent=1 // pred_check_branch
      %29 = sbr.rel (0) target = $region9
    $region8: #{tpu_custom_call.1} parent=1 // pred_region
      %s31 = ssub.s32 1024, 1024
      %32 = vsyncadd [#allocation6], %s31
      %s33 = sshll.u32 [#allocation5], 4
      %s34 = int_to_ptr.vmem [resolvable:$true] %s33
      %39 = dma.hbm_to_vmem [thread:$0]  %s1, 1024, %s34, [#allocation6], 64, 64, 4
    $region9: #{tpu_custom_call.1} parent=1 // pred_fallthru
      _
    // Predicated region
    $region10: #{tpu_custom_call.1} parent=1 // pred_check
      _
    $region11: #{tpu_custom_call.1} parent=1 // pred_check_branch
      %41 = sbr.rel (0) target = $region13
    $region12: #{tpu_custom_call.1} parent=1 // pred_region
      _
    $region13: #{tpu_custom_call.1} parent=1 // pred_fallthru
      _
    // Predicated region
    $region14: #{tpu_custom_call.1} parent=1 // pred_check
      _
    $region15: #{tpu_custom_call.1} parent=1 // pred_check_branch
      %43 = sbr.rel (0) target = $region17
    $region16: #{tpu_custom_call.1} parent=1 // pred_region
      %s45 = ssub.s32 1024, 1024
      %46 = vsyncadd [#allocation6], %s45
      %s47 = sshll.u32 [#allocation7], 4
      %s48 = int_to_ptr.vmem [resolvable:$true] %s47
      %53 = dma.hbm_to_vmem [thread:$0]  %s3, 1024, %s48, [#allocation6], 64, 64, 4
    $region17: #{tpu_custom_call.1} parent=1 // pred_fallthru
      _
    // Predicated region
    $region18: #{tpu_custom_call.1} parent=1 // pred_check
      _
    $region19: #{tpu_custom_call.1} parent=1 // pred_check_branch
      %55 = sbr.rel (0) target = $region21
    $region20: #{tpu_custom_call.1} parent=1 // pred_region
      _
    $region21: #{tpu_custom_call.1} parent=1 // pred_fallthru
      _
    // Predicated region
    $region22: #{tpu_custom_call.1} parent=1 // pred_check
      _
    $region23: #{tpu_custom_call.1} parent=1 // pred_check_branch
      %57 = sbr.rel (0) target = $region25
    $region24: #{tpu_custom_call.1} parent=1 // pred_region
      %s59 = ssub.s32 1024, 1024
      %60 = vsyncadd [#allocation9], %s59
      %s61 = sshll.u32 [#allocation8], 4
      %s62 = int_to_ptr.vmem [resolvable:$true] %s61
      %67 = dma.hbm_to_vmem [thread:$0]  %s5, 1024, %s62, [#allocation9], 64, 64, 4
    $region25: #{tpu_custom_call.1} parent=1 // pred_fallthru
      _
    // Predicated region
    $region26: #{tpu_custom_call.1} parent=1 // pred_check
      _
    $region27: #{tpu_custom_call.1} parent=1 // pred_check_branch
      %69 = sbr.rel (0) target = $region29
    $region28: #{tpu_custom_call.1} parent=1 // pred_region
      _
    $region29: #{tpu_custom_call.1} parent=1 // pred_fallthru
      _
    // Predicated region
    $region30: #{tpu_custom_call.1} parent=1 // pred_check
      _
    $region31: #{tpu_custom_call.1} parent=1 // pred_check_branch
      %71 = sbr.rel (0) target = $region33
    $region32: #{tpu_custom_call.1} parent=1 // pred_region
      %s73 = ssub.s32 1024, 1024
      %74 = vsyncadd [#allocation9], %s73
      %s75 = sshll.u32 [#allocation10], 4
      %s76 = int_to_ptr.vmem [resolvable:$true] %s75
      %81 = dma.hbm_to_vmem [thread:$0]  %s7, 1024, %s76, [#allocation9], 64, 64, 4
    $region33: #{tpu_custom_call.1} parent=1 // pred_fallthru
      _
    // Predicated region
    $region34: #{tpu_custom_call.1} parent=1 // pred_check
      _
    $region35: #{tpu_custom_call.1} parent=1 // pred_check_branch
      %83 = sbr.rel (0) target = $region37
    $region36: #{tpu_custom_call.1} parent=1 // pred_region
      _
    $region37: #{tpu_custom_call.1} parent=1 // pred_fallthru
      _
    // Predicated region
    $region38: #{tpu_custom_call.1} parent=1 // pred_check
      _
    $region39: #{tpu_custom_call.1} parent=1 // pred_check_branch
      %85 = sbr.rel (0) target = $region41
    $region40: #{tpu_custom_call.1} parent=1 // pred_region
      %86 = dma.done [#allocation3], 16
    $region41: #{tpu_custom_call.1} parent=1 // pred_fallthru
      _
    // Predicated region
    $region42: #{tpu_custom_call.1} parent=1 // pred_check
      _
    $region43: #{tpu_custom_call.1} parent=1 // pred_check_branch
      %88 = sbr.rel (0) target = $region45
    $region44: #{tpu_custom_call.1} parent=1 // pred_region
      %89 = dma.done [#allocation6], 1024
    $region45: #{tpu_custom_call.1} parent=1 // pred_fallthru
      _
    // Predicated region
    $region46: #{tpu_custom_call.1} parent=1 // pred_check
      _
    $region47: #{tpu_custom_call.1} parent=1 // pred_check_branch
      %91 = sbr.rel (0) target = $region49
    $region48: #{tpu_custom_call.1} parent=1 // pred_region
      %92 = dma.done [#allocation6], 1024
    $region49: #{tpu_custom_call.1} parent=1 // pred_fallthru
      _
    // Predicated region
    $region50: #{tpu_custom_call.1} parent=1 // pred_check
      _
    $region51: #{tpu_custom_call.1} parent=1 // pred_check_branch
      %94 = sbr.rel (0) target = $region53
    $region52: #{tpu_custom_call.1} parent=1 // pred_region
      %95 = dma.done [#allocation9], 1024
    $region53: #{tpu_custom_call.1} parent=1 // pred_fallthru
      _
    // Predicated region
    $region54: #{tpu_custom_call.1} parent=1 // pred_check
      _
    $region55: #{tpu_custom_call.1} parent=1 // pred_check_branch
      %97 = sbr.rel (0) target = $region57
    $region56: #{tpu_custom_call.1} parent=1 // pred_region
      %98 = dma.done [#allocation9], 1024
    $region57: #{tpu_custom_call.1} parent=1 // pred_fallthru
      _
    %v100 = vld [vmem:[#allocation2] sm:$0x1]
    %v101 = vpack.c.bf16 %v100, %v100
    %v102 = vld [vmem:[#allocation5] sm:$0xf]
    %v103 = vld [vmem:[#allocation5 + $0x4] sm:$0xf]
    %v104 = vld [vmem:[#allocation5 + $0x8] sm:$0xf]
    %v105 = vld [vmem:[#allocation5 + $0xc] sm:$0xf]
    %v106 = vld [vmem:[#allocation5 + $0x10] sm:$0xf]
    %v107 = vld [vmem:[#allocation5 + $0x14] sm:$0xf]
    %v108 = vld [vmem:[#allocation5 + $0x18] sm:$0xf]
    %v109 = vld [vmem:[#allocation5 + $0x1c] sm:$0xf]
    %v110 = vld [vmem:[#allocation5 + $0x20] sm:$0xf]
    %v111 = vld [vmem:[#allocation5 + $0x24] sm:$0xf]
    %v112 = vld [vmem:[#allocation5 + $0x28] sm:$0xf]
    %v113 = vld [vmem:[#allocation5 + $0x2c] sm:$0xf]
    %v114 = vld [vmem:[#allocation5 + $0x30] sm:$0xf]
    %v115 = vld [vmem:[#allocation5 + $0x34] sm:$0xf]
    %v116 = vld [vmem:[#allocation5 + $0x38] sm:$0xf]
    %v117 = vld [vmem:[#allocation5 + $0x3c] sm:$0xf]
    %v118 = vld [vmem:[%s2] sm:$0x1]
    %v135 = vunpack.c.l.b16 %v102
    %v136 = vunpack.c.l.b16 %v103
    %v137 = vunpack.c.l.b16 %v104
    %v138 = vunpack.c.l.b16 %v105
    %v139 = vunpack.c.l.b16 %v106
    %v140 = vunpack.c.l.b16 %v107
    %v141 = vunpack.c.l.b16 %v108
    %v142 = vunpack.c.l.b16 %v109
    %v143 = vunpack.c.l.b16 %v110
    %v144 = vunpack.c.l.b16 %v111
    %v145 = vunpack.c.l.b16 %v112
    %v146 = vunpack.c.l.b16 %v113
    %v147 = vunpack.c.l.b16 %v114
    %v148 = vunpack.c.l.b16 %v115
    %v149 = vunpack.c.l.b16 %v116
    %v150 = vunpack.c.l.b16 %v117
    %v151 = vpack.c.b16 %v136, %v135
    %v152 = vpack.c.b16 %v138, %v137
    %v153 = vpack.c.b16 %v140, %v139
    %v154 = vpack.c.b16 %v142, %v141
    %v155 = vpack.c.b16 %v144, %v143
    %v156 = vpack.c.b16 %v146, %v145
    %v157 = vpack.c.b16 %v148, %v147
    %v158 = vpack.c.b16 %v150, %v149
    %167 = vmatprep.subr.bf16.mxu0 0
    %168 = vmatpush1.bf16.msra.mxu0 %v158
    %169 = vmatprep.subr.bf16.mxu0 0
    %170 = vmatpush1.bf16.msra.mxu0 %v157
    %171 = vmatprep.subr.bf16.mxu0 0
    %172 = vmatpush1.bf16.msra.mxu0 %v156
    %173 = vmatprep.subr.bf16.mxu0 0
    %174 = vmatpush1.bf16.msra.mxu0 %v155
    %175 = vmatprep.subr.bf16.mxu0 0
    %176 = vmatpush1.bf16.msra.mxu0 %v154
    %177 = vmatprep.subr.bf16.mxu0 0
    %178 = vmatpush1.bf16.msra.mxu0 %v153
    %179 = vmatprep.subr.bf16.mxu0 0
    %180 = vmatpush1.bf16.msra.mxu0 %v152
    %181 = vmatprep.subr.bf16.mxu0 0
    %182 = vmatpush1.bf16.msra.mxu0 %v151
    %183 = vmatprep.subr.bf16.mxu0 0
    %184 = vmatpush2.bf16.msra.mxu0 0
    %185 = vmatprep.subr.bf16.mxu0 0
    %186 = vmatpush2.bf16.msra.mxu0 0
    %187 = vmatprep.subr.bf16.mxu0 0
    %188 = vmatpush2.bf16.msra.mxu0 0
    %189 = vmatprep.subr.bf16.mxu0 0
    %190 = vmatpush2.bf16.msra.mxu0 0
    %191 = vmatprep.subr.bf16.mxu0 0
    %192 = vmatpush2.bf16.msra.mxu0 0
    %193 = vmatprep.subr.bf16.mxu0 0
    %194 = vmatpush2.bf16.msra.mxu0 0
    %195 = vmatprep.subr.bf16.mxu0 0
    %196 = vmatpush2.bf16.msra.mxu0 0
    %197 = vmatprep.subr.bf16.mxu0 0
    %198 = vmatpush2.bf16.msra.mxu0 0
    %199 = vmatprep.mubr.bf16.mxu0 0
    %200 = vmatmul.mubr.bf16.gmra.mxu0 %v101
    %v201 = vpop.f32.mrf.mxu0
    %v202 = vadd.f32 %v118, %v201
    %v203 = vpop.f32.mrf.mxu0
    %v204 = vpop.f32.mrf.mxu0
    %v205 = vpop.f32.mrf.mxu0
    %206 = vdwg.mxu0
    %v207 = vmax.f32 %v202, 0.0
    %v208 = vpack.c.bf16 %v207, %v207
    %v209 = vld [vmem:[#allocation7] sm:$0xf]
    %v210 = vld [vmem:[#allocation7 + $0x4] sm:$0xf]
    %v211 = vld [vmem:[#allocation7 + $0x8] sm:$0xf]
    %v212 = vld [vmem:[#allocation7 + $0xc] sm:$0xf]
    %v213 = vld [vmem:[#allocation7 + $0x10] sm:$0xf]
    %v214 = vld [vmem:[#allocation7 + $0x14] sm:$0xf]
    %v215 = vld [vmem:[#allocation7 + $0x18] sm:$0xf]
    %v216 = vld [vmem:[#allocation7 + $0x1c] sm:$0xf]
    %v217 = vld [vmem:[#allocation7 + $0x20] sm:$0xf]
    %v218 = vld [vmem:[#allocation7 + $0x24] sm:$0xf]
    %v219 = vld [vmem:[#allocation7 + $0x28] sm:$0xf]
    %v220 = vld [vmem:[#allocation7 + $0x2c] sm:$0xf]
    %v221 = vld [vmem:[#allocation7 + $0x30] sm:$0xf]
    %v222 = vld [vmem:[#allocation7 + $0x34] sm:$0xf]
    %v223 = vld [vmem:[#allocation7 + $0x38] sm:$0xf]
    %v224 = vld [vmem:[#allocation7 + $0x3c] sm:$0xf]
    %v225 = vld [vmem:[%s4] sm:$0x1]
    %v242 = vunpack.c.l.b16 %v209
    %v243 = vunpack.c.l.b16 %v210
    %v244 = vunpack.c.l.b16 %v211
    %v245 = vunpack.c.l.b16 %v212
    %v246 = vunpack.c.l.b16 %v213
    %v247 = vunpack.c.l.b16 %v214
    %v248 = vunpack.c.l.b16 %v215
    %v249 = vunpack.c.l.b16 %v216
    %v250 = vunpack.c.l.b16 %v217
    %v251 = vunpack.c.l.b16 %v218
    %v252 = vunpack.c.l.b16 %v219
    %v253 = vunpack.c.l.b16 %v220
    %v254 = vunpack.c.l.b16 %v221
    %v255 = vunpack.c.l.b16 %v222
    %v256 = vunpack.c.l.b16 %v223
    %v257 = vunpack.c.l.b16 %v224
    %v258 = vpack.c.b16 %v243, %v242
    %v259 = vpack.c.b16 %v245, %v244
    %v260 = vpack.c.b16 %v247, %v246
    %v261 = vpack.c.b16 %v249, %v248
    %v262 = vpack.c.b16 %v251, %v250
    %v263 = vpack.c.b16 %v253, %v252
    %v264 = vpack.c.b16 %v255, %v254
    %v265 = vpack.c.b16 %v257, %v256
    %274 = vmatprep.subr.bf16.mxu0 0
    %275 = vmatpush1.bf16.msra.mxu0 %v265
    %276 = vmatprep.subr.bf16.mxu0 0
    %277 = vmatpush1.bf16.msra.mxu0 %v264
    %278 = vmatprep.subr.bf16.mxu0 0
    %279 = vmatpush1.bf16.msra.mxu0 %v263
    %280 = vmatprep.subr.bf16.mxu0 0
    %281 = vmatpush1.bf16.msra.mxu0 %v262
    %282 = vmatprep.subr.bf16.mxu0 0
    %283 = vmatpush1.bf16.msra.mxu0 %v261
    %284 = vmatprep.subr.bf16.mxu0 0
    %285 = vmatpush1.bf16.msra.mxu0 %v260
    %286 = vmatprep.subr.bf16.mxu0 0
    %287 = vmatpush1.bf16.msra.mxu0 %v259
    %288 = vmatprep.subr.bf16.mxu0 0
    %289 = vmatpush1.bf16.msra.mxu0 %v258
    %290 = vmatprep.subr.bf16.mxu0 0
    %291 = vmatpush2.bf16.msra.mxu0 0
    %292 = vmatprep.subr.bf16.mxu0 0
    %293 = vmatpush2.bf16.msra.mxu0 0
    %294 = vmatprep.subr.bf16.mxu0 0
    %295 = vmatpush2.bf16.msra.mxu0 0
    %296 = vmatprep.subr.bf16.mxu0 0
    %297 = vmatpush2.bf16.msra.mxu0 0
    %298 = vmatprep.subr.bf16.mxu0 0
    %299 = vmatpush2.bf16.msra.mxu0 0
    %300 = vmatprep.subr.bf16.mxu0 0
    %301 = vmatpush2.bf16.msra.mxu0 0
    %302 = vmatprep.subr.bf16.mxu0 0
    %303 = vmatpush2.bf16.msra.mxu0 0
    %304 = vmatprep.subr.bf16.mxu0 0
    %305 = vmatpush2.bf16.msra.mxu0 0
    %306 = vmatprep.mubr.bf16.mxu0 0
    %307 = vmatmul.mubr.bf16.gmra.mxu0 %v208
    %v308 = vpop.f32.mrf.mxu0
    %v309 = vadd.f32 %v225, %v308
    %v310 = vpop.f32.mrf.mxu0
    %v311 = vpop.f32.mrf.mxu0
    %v312 = vpop.f32.mrf.mxu0
    %313 = vdwg.mxu0
    %v314 = vmax.f32 %v309, 0.0
    %v315 = vpack.c.bf16 %v314, %v314
    %v316 = vld [vmem:[#allocation8] sm:$0xf]
    %v317 = vld [vmem:[#allocation8 + $0x4] sm:$0xf]
    %v318 = vld [vmem:[#allocation8 + $0x8] sm:$0xf]
    %v319 = vld [vmem:[#allocation8 + $0xc] sm:$0xf]
    %v320 = vld [vmem:[#allocation8 + $0x10] sm:$0xf]
    %v321 = vld [vmem:[#allocation8 + $0x14] sm:$0xf]
    %v322 = vld [vmem:[#allocation8 + $0x18] sm:$0xf]
    %v323 = vld [vmem:[#allocation8 + $0x1c] sm:$0xf]
    %v324 = vld [vmem:[#allocation8 + $0x20] sm:$0xf]
    %v325 = vld [vmem:[#allocation8 + $0x24] sm:$0xf]
    %v326 = vld [vmem:[#allocation8 + $0x28] sm:$0xf]
    %v327 = vld [vmem:[#allocation8 + $0x2c] sm:$0xf]
    %v328 = vld [vmem:[#allocation8 + $0x30] sm:$0xf]
    %v329 = vld [vmem:[#allocation8 + $0x34] sm:$0xf]
    %v330 = vld [vmem:[#allocation8 + $0x38] sm:$0xf]
    %v331 = vld [vmem:[#allocation8 + $0x3c] sm:$0xf]
    %v332 = vld [vmem:[%s6] sm:$0x1]
    %v349 = vunpack.c.l.b16 %v316
    %v350 = vunpack.c.l.b16 %v317
    %v351 = vunpack.c.l.b16 %v318
    %v352 = vunpack.c.l.b16 %v319
    %v353 = vunpack.c.l.b16 %v320
    %v354 = vunpack.c.l.b16 %v321
    %v355 = vunpack.c.l.b16 %v322
    %v356 = vunpack.c.l.b16 %v323
    %v357 = vunpack.c.l.b16 %v324
    %v358 = vunpack.c.l.b16 %v325
    %v359 = vunpack.c.l.b16 %v326
    %v360 = vunpack.c.l.b16 %v327
    %v361 = vunpack.c.l.b16 %v328
    %v362 = vunpack.c.l.b16 %v329
    %v363 = vunpack.c.l.b16 %v330
    %v364 = vunpack.c.l.b16 %v331
    %v365 = vpack.c.b16 %v350, %v349
    %v366 = vpack.c.b16 %v352, %v351
    %v367 = vpack.c.b16 %v354, %v353
    %v368 = vpack.c.b16 %v356, %v355
    %v369 = vpack.c.b16 %v358, %v357
    %v370 = vpack.c.b16 %v360, %v359
    %v371 = vpack.c.b16 %v362, %v361
    %v372 = vpack.c.b16 %v364, %v363
    %381 = vmatprep.subr.bf16.mxu0 0
    %382 = vmatpush1.bf16.msra.mxu0 %v372
    %383 = vmatprep.subr.bf16.mxu0 0
    %384 = vmatpush1.bf16.msra.mxu0 %v371
    %385 = vmatprep.subr.bf16.mxu0 0
    %386 = vmatpush1.bf16.msra.mxu0 %v370
    %387 = vmatprep.subr.bf16.mxu0 0
    %388 = vmatpush1.bf16.msra.mxu0 %v369
    %389 = vmatprep.subr.bf16.mxu0 0
    %390 = vmatpush1.bf16.msra.mxu0 %v368
    %391 = vmatprep.subr.bf16.mxu0 0
    %392 = vmatpush1.bf16.msra.mxu0 %v367
    %393 = vmatprep.subr.bf16.mxu0 0
    %394 = vmatpush1.bf16.msra.mxu0 %v366
    %395 = vmatprep.subr.bf16.mxu0 0
    %396 = vmatpush1.bf16.msra.mxu0 %v365
    %397 = vmatprep.subr.bf16.mxu0 0
    %398 = vmatpush2.bf16.msra.mxu0 0
    %399 = vmatprep.subr.bf16.mxu0 0
    %400 = vmatpush2.bf16.msra.mxu0 0
    %401 = vmatprep.subr.bf16.mxu0 0
    %402 = vmatpush2.bf16.msra.mxu0 0
    %403 = vmatprep.subr.bf16.mxu0 0
    %404 = vmatpush2.bf16.msra.mxu0 0
    %405 = vmatprep.subr.bf16.mxu0 0
    %406 = vmatpush2.bf16.msra.mxu0 0
    %407 = vmatprep.subr.bf16.mxu0 0
    %408 = vmatpush2.bf16.msra.mxu0 0
    %409 = vmatprep.subr.bf16.mxu0 0
    %410 = vmatpush2.bf16.msra.mxu0 0
    %411 = vmatprep.subr.bf16.mxu0 0
    %412 = vmatpush2.bf16.msra.mxu0 0
    %413 = vmatprep.mubr.bf16.mxu0 0
    %414 = vmatmul.mubr.bf16.gmra.mxu0 %v315
    %v415 = vpop.f32.mrf.mxu0
    %v416 = vadd.f32 %v332, %v415
    %v417 = vpop.f32.mrf.mxu0
    %v418 = vpop.f32.mrf.mxu0
    %v419 = vpop.f32.mrf.mxu0
    %420 = vdwg.mxu0
    %v421 = vmax.f32 %v416, 0.0
    %v422 = vpack.c.bf16 %v421, %v421
    %v423 = vld [vmem:[#allocation10] sm:$0xf]
    %v424 = vld [vmem:[#allocation10 + $0x4] sm:$0xf]
    %v425 = vld [vmem:[#allocation10 + $0x8] sm:$0xf]
    %v426 = vld [vmem:[#allocation10 + $0xc] sm:$0xf]
    %v427 = vld [vmem:[#allocation10 + $0x10] sm:$0xf]
    %v428 = vld [vmem:[#allocation10 + $0x14] sm:$0xf]
    %v429 = vld [vmem:[#allocation10 + $0x18] sm:$0xf]
    %v430 = vld [vmem:[#allocation10 + $0x1c] sm:$0xf]
    %v431 = vld [vmem:[#allocation10 + $0x20] sm:$0xf]
    %v432 = vld [vmem:[#allocation10 + $0x24] sm:$0xf]
    %v433 = vld [vmem:[#allocation10 + $0x28] sm:$0xf]
    %v434 = vld [vmem:[#allocation10 + $0x2c] sm:$0xf]
    %v435 = vld [vmem:[#allocation10 + $0x30] sm:$0xf]
    %v436 = vld [vmem:[#allocation10 + $0x34] sm:$0xf]
    %v437 = vld [vmem:[#allocation10 + $0x38] sm:$0xf]
    %v438 = vld [vmem:[#allocation10 + $0x3c] sm:$0xf]
    %v439 = vld [vmem:[%s8] sm:$0x1]
    %v456 = vunpack.c.l.b16 %v423
    %v457 = vunpack.c.l.b16 %v424
    %v458 = vunpack.c.l.b16 %v425
    %v459 = vunpack.c.l.b16 %v426
    %v460 = vunpack.c.l.b16 %v427
    %v461 = vunpack.c.l.b16 %v428
    %v462 = vunpack.c.l.b16 %v429
    %v463 = vunpack.c.l.b16 %v430
    %v464 = vunpack.c.l.b16 %v431
    %v465 = vunpack.c.l.b16 %v432
    %v466 = vunpack.c.l.b16 %v433
    %v467 = vunpack.c.l.b16 %v434
    %v468 = vunpack.c.l.b16 %v435
    %v469 = vunpack.c.l.b16 %v436
    %v470 = vunpack.c.l.b16 %v437
    %v471 = vunpack.c.l.b16 %v438
    %v472 = vpack.c.b16 %v457, %v456
    %v473 = vpack.c.b16 %v459, %v458
    %v474 = vpack.c.b16 %v461, %v460
    %v475 = vpack.c.b16 %v463, %v462
    %v476 = vpack.c.b16 %v465, %v464
    %v477 = vpack.c.b16 %v467, %v466
    %v478 = vpack.c.b16 %v469, %v468
    %v479 = vpack.c.b16 %v471, %v470
    %488 = vmatprep.subr.bf16.mxu0 0
    %489 = vmatpush1.bf16.msra.mxu0 %v479
    %490 = vmatprep.subr.bf16.mxu0 0
    %491 = vmatpush1.bf16.msra.mxu0 %v478
    %492 = vmatprep.subr.bf16.mxu0 0
    %493 = vmatpush1.bf16.msra.mxu0 %v477
    %494 = vmatprep.subr.bf16.mxu0 0
    %495 = vmatpush1.bf16.msra.mxu0 %v476
    %496 = vmatprep.subr.bf16.mxu0 0
    %497 = vmatpush1.bf16.msra.mxu0 %v475
    %498 = vmatprep.subr.bf16.mxu0 0
    %499 = vmatpush1.bf16.msra.mxu0 %v474
    %500 = vmatprep.subr.bf16.mxu0 0
    %501 = vmatpush1.bf16.msra.mxu0 %v473
    %502 = vmatprep.subr.bf16.mxu0 0
    %503 = vmatpush1.bf16.msra.mxu0 %v472
    %504 = vmatprep.subr.bf16.mxu0 0
    %505 = vmatpush2.bf16.msra.mxu0 0
    %506 = vmatprep.subr.bf16.mxu0 0
    %507 = vmatpush2.bf16.msra.mxu0 0
    %508 = vmatprep.subr.bf16.mxu0 0
    %509 = vmatpush2.bf16.msra.mxu0 0
    %510 = vmatprep.subr.bf16.mxu0 0
    %511 = vmatpush2.bf16.msra.mxu0 0
    %512 = vmatprep.subr.bf16.mxu0 0
    %513 = vmatpush2.bf16.msra.mxu0 0
    %514 = vmatprep.subr.bf16.mxu0 0
    %515 = vmatpush2.bf16.msra.mxu0 0
    %516 = vmatprep.subr.bf16.mxu0 0
    %517 = vmatpush2.bf16.msra.mxu0 0
    %518 = vmatprep.subr.bf16.mxu0 0
    %519 = vmatpush2.bf16.msra.mxu0 0
    %520 = vmatprep.mubr.bf16.mxu0 0
    %521 = vmatmul.mubr.bf16.gmra.mxu0 %v422
    %v522 = vpop.f32.mrf.mxu0
    %v523 = vadd.f32 %v439, %v522
    %v524 = vpop.f32.mrf.mxu0
    %v525 = vpop.f32.mrf.mxu0
    %v526 = vpop.f32.mrf.mxu0
    %527 = vdwg.mxu0
    %vm528 = vcmask 1040384
    %v529 = vsel %vm528, %v523, -inf
    %530 = vmax.xlane.f32.xlu0 %v529
    %v531 = vpop.xlane.xlu0 %530
    %v532 = vsub.f32 %v523, %v531
    %v533 = vmul.f32 %v532, 1.442695
    %v534 = vpow.pop %v533
    %v535 = vsel %vm528, %v534, 0.0
    %536 = vadd.xlane.f32.xlu0 %v535
    %v537 = vpop.xlane.xlu0 %536
    %v538 = vlog2.pop %v537
    %v539 = vmul.f32 %v538, 0.6931472
    %v540 = vadd.f32 %v539, %v531
    %v541 = vsub.f32 %v523, %v540
    %542 = vst [vmem:[#allocation11] sm:$0x1] %v541
    // Predicated region
    $region58: #{tpu_custom_call.1} parent=1 // pred_check
      _
    $region59: #{tpu_custom_call.1} parent=1 // pred_check_branch
      %544 = sbr.rel (0) target = $region61
    $region60: #{tpu_custom_call.1} parent=1 // pred_region
      %s546 = ssub.s32 16, 16
      %547 = vsyncadd [#allocation4], %s546
      %s549 = sshll.u32 [#allocation11], 4
      %s550 = int_to_ptr.vmem [resolvable:$true] %s549
      %552 = dma.vmem_to_hbm [thread:$0]  %s550, 16, %s9, [#allocation4]
    $region61: #{tpu_custom_call.1} parent=1 // pred_fallthru
      _
    // Predicated region
    $region62: #{tpu_custom_call.1} parent=1 // pred_check
      _
    $region63: #{tpu_custom_call.1} parent=1 // pred_check_branch
      %554 = sbr.rel (0) target = $region65
    $region64: #{tpu_custom_call.1} parent=1 // pred_region
      %555 = dma.done [#allocation4], 16
    $region65: #{tpu_custom_call.1} parent=1 // pred_fallthru
      _
    %556 = vsyncpa [#allocation3], 1
    %557 = vsyncpa [#allocation6], 1
    %558 = vsyncpa [#allocation9], 1
    %559 = vsyncpa [#allocation4], 1

</llo_original>
